<compile_context>
chip_gen: v6e
topology: v6e:2x2x1
jax: 0.10.0
libtpu: 0.0.40
codegen_flags: <defaults>
</compile_context>

<pallas_src>
import functools

import jax
import jax.numpy as jnp
import numpy as np
from jax.experimental import pallas as pl
from jax.experimental.pallas import tpu as pltpu

KERNEL_SIZES = (8, 5, 3)   # main-path conv kernel sizes (InceptionTime ResNet block)
BN_EPS = 1e-5


def _round_up(v, m):
    return ((v + m - 1) // m) * m


def _tpu_vmem_and_cores():
    """Best-effort (VMEM bytes per core, #TensorCores per Pallas device)."""
    vmem = 64 << 20                                   # conservative fallback (v7x)
    try:
        info = pltpu.get_tpu_info()
        vmem = int(getattr(info, "vmem_capacity_bytes", vmem)) or vmem
    except Exception:
        pass
    cores = 1
    try:
        kind = jax.devices()[0].device_kind.lower()
        # Megacore / 2-TensorCore parts: v4, v5p, v7x.
        if ("v4" in kind or "v5p" in kind or kind.strip() == "tpu v5"
                or "v7" in kind or "7x" in kind):
            cores = 2
    except Exception:
        pass
    return vmem, cores


def _make_kernel(stage_defs, fuse_residual, c_out_p, lane_tile, seg_len, valid_len):
    """Kernel body for one lane tile (= batch_per_step examples x seg_len steps).

    stage_defs    : tuple of (kernel_size, use_tap_dots) for the 3 main stages.
    fuse_residual : stage-1 LHS has the 1x1 residual conv stacked under it
                    (output rows doubled); otherwise the last two param refs
                    are (wr, tr) and the residual is its own small matmul.
    """
    T, Lp, L = lane_tile, seg_len, valid_len
    max_left = max((k - 1) // 2 for k, _ in stage_defs)
    max_right = max(k - 1 - (k - 1) // 2 for k, _ in stage_defs)

    def kernel(*refs):
        x_ref, o_ref = refs[0], refs[-1]
        params = refs[1:-1]
        cdt = x_ref.dtype

        # Lane position within each example's (padded) segment. Tiles are
        # segment aligned (T is a multiple of Lp), so an in-tile iota suffices.
        pos = jax.lax.broadcasted_iota(jnp.int32, (1, T), 1)
        if T != Lp:
            pos = pos % Lp

        # (1, T) multiplicative 0/1 masks (compute dtype), one per tap offset
        # d = k - pad_left, shared by every stage.
        #   d < 0: positions < -d would read left "same"-padding / the previous
        #          example.
        #   d > 0: positions >= L-d would read right padding, the padded length
        #          tail (garbage from earlier stages) or the next example.
        masks = {0: None}
        for d in range(-max_left, max_right + 1):
            if d == 0:
                continue
            m = (pos >= -d) if d < 0 else (pos < (L - d))
            masks[d] = m.astype(cdt)

        def tap(h, d):
            # Shifted copy h[:, p+d] via an XLU roll; boundary lanes zeroed by an
            # exact 0/1 multiply, everything in the compute dtype.
            s = h if d == 0 else pltpu.roll(h, shift=(-d) % T, axis=1)
            return s if masks[d] is None else s * masks[d]

        def conv_im2col(h, w_ref, t_ref, ksize, relu, split=None):
            # One MXU push per stage on a tap-major (K*C, T) im2col RHS.
            pad_left = (ksize - 1) // 2
            rhs = jnp.concatenate([tap(h, k - pad_left) for k in range(ksize)],
                                  axis=0)
            y = jnp.dot(w_ref[...], rhs, preferred_element_type=jnp.float32)
            y = y + t_ref[...]                        # folded conv-bias + BN shift
            if split is None:
                return jnp.maximum(y, 0.0) if relu else y
            return jnp.maximum(y[:split], 0.0), y[split:]

        def conv_taps(h, w_ref, t_ref, ksize, relu):
            # K accumulating (C_out, C) @ (C, T) dots; the (K*C, T) temporary
            # never materializes (used when C already fills the MXU contraction).
            pad_left = (ksize - 1) // 2
            acc = None
            for k in range(ksize):
                p = jnp.dot(w_ref[k], tap(h, k - pad_left),
                            preferred_element_type=jnp.float32)
                acc = p if acc is None else acc + p
            y = acc + t_ref[...]
            return jnp.maximum(y, 0.0) if relu else y

        x = x_ref[...]                                # (C_in_p, T), compute dtype
        k0, taps0 = stage_defs[0]
        w0, t0 = params[0], params[1]
        if fuse_residual:
            # Residual 1x1 conv rides the stage-1 matmul (rows stacked under w1).
            h, r = conv_im2col(x, w0, t0, k0, relu=True, split=c_out_p)
        else:
            # Residual computed here so x's live range ends with stage 1.
            wr_ref, tr_ref = params[-2], params[-1]
            r = jnp.dot(wr_ref[...], x, preferred_element_type=jnp.float32)
            r = r + tr_ref[...]
            h = (conv_taps if taps0 else conv_im2col)(x, w0, t0, k0, True)

        idx = 2
        for ksize, use_taps in stage_defs[1:]:
            w_ref, t_ref = params[idx], params[idx + 1]
            idx += 2
            hin = h.astype(cdt)       # cast BEFORE rolls/masks/concat (bf16 path)
            h = (conv_taps if use_taps else conv_im2col)(hin, w_ref, t_ref,
                                                         ksize, True)

        o_ref[...] = (h + r).astype(o_ref.dtype)

    return kernel


def _fold_conv_bn(layer, c_in_pad, c_out_pad, eps=BN_EPS):
    """Fold conv bias + eval-mode BN into the conv weight (scale) and a shift.

    Returns:
      w     : (c_out_pad, c_in_pad, K) float32, BN scale folded in, zero-padded.
      shift : (c_out_pad, 1) float32, added after the matmul.
    Padded rows/cols are zero, so padded channels stay exactly zero.
    """
    w = layer["w"]                                              # (C_out, C_in, K)
    scale = layer["gamma"] * jax.lax.rsqrt(layer["var"] + eps)  # (C_out,)
    shift = (layer["b"] - layer["mean"]) * scale + layer["beta"]
    w = w * scale[:, None, None]
    c_out, c_in, k = w.shape
    w = jnp.pad(w, ((0, c_out_pad - c_out), (0, c_in_pad - c_in), (0, 0)))
    shift = jnp.pad(shift, (0, c_out_pad - c_out))
    return w, shift[:, None].astype(jnp.float32)


@functools.partial(jax.jit, static_argnames=("compute_dtype", "out_dtype",
                                              "batch_per_step", "tap_dot_threshold"))
def resnet_block_forward(x, layers, residual, *,
                         compute_dtype=jnp.bfloat16, out_dtype=None,
                         batch_per_step=None, tap_dot_threshold=128):
    if out_dtype is None:
        out_dtype = compute_dtype
    N, c_in, L = x.shape
    c_out = layers[0]["w"].shape[0]

    cbytes = jnp.dtype(compute_dtype).itemsize
    obytes = jnp.dtype(out_dtype).itemsize

    # Channel padding: one full vreg of sublanes for the compute dtype (16 rows
    # for bf16, 8 for f32) so im2col pieces / matmul operands stay tile-aligned.
    sub = 8 * (4 // cbytes)
    c_in_p = _round_up(c_in, sub)
    c_out_p = _round_up(c_out, sub)
    l_pad = _round_up(L, 128)                 # lane-dense, unmasked output stores

    # Per-stage path: single im2col matmul (small C) vs K accumulating per-tap
    # dots (C already fills the MXU contraction; avoids the (K*C, T) temporary).
    stage_channels = (c_in_p, c_out_p, c_out_p)
    stage_defs = tuple((k, c >= tap_dot_threshold)
                       for k, c in zip(KERNEL_SIZES, stage_channels))
    fuse_residual = not stage_defs[0][1]

    vmem_bytes, num_tc = _tpu_vmem_and_cores()

    # Lane-tile sizing from the VMEM budget: double-buffered in/out blocks, the
    # largest im2col temporary, and the f32 intermediates (h, r, stage result).
    if batch_per_step is None:
        per_lane = 2 * c_in_p * cbytes + 2 * c_out_p * obytes
        per_lane += max([k * c * cbytes for (k, taps), c
                         in zip(stage_defs, stage_channels) if not taps],
                        default=0)
        per_lane += 4 * c_out_p * 4
        budget = int(vmem_bytes * 0.65)
        bps = max(1, budget // (per_lane * l_pad))
        bps = min(bps, N)
        if num_tc >= 2 and N >= 2:
            # Keep >= 2 "parallel" grid steps so both TensorCores get work.
            bps = min(bps, max(1, N // num_tc))
    else:
        bps = batch_per_step
    n_pad = _round_up(N, bps)
    num_steps = n_pad // bps
    tile = bps * l_pad
    # TODO(synk): for very long L, additionally tile the length axis with a
    # (K-1) halo so a single example still fits the per-step VMEM budget.

    # (N,C,L) -> (C_pad, N_pad*L_pad): channels on sublanes, batch*length on lanes.
    xp = jnp.pad(x, ((0, n_pad - N), (0, c_in_p - c_in), (0, l_pad - L)))
    x2d = jnp.transpose(xp, (1, 0, 2)).reshape(c_in_p, n_pad * l_pad)
    x2d = x2d.astype(compute_dtype)          # halves HBM->VMEM DMA bytes when bf16

    folded = [_fold_conv_bn(layers[0], c_in_p, c_out_p),
              _fold_conv_bn(layers[1], c_out_p, c_out_p),
              _fold_conv_bn(layers[2], c_out_p, c_out_p)]
    wrf, tr = _fold_conv_bn(residual, c_in_p, c_out_p)
    wr2d = wrf[:, :, 0]                                        # (c_out_p, c_in_p)

    params = []
    for i, ((wf, tf), (ksize, use_taps)) in enumerate(zip(folded, stage_defs)):
        if use_taps:
            w = jnp.transpose(wf, (2, 0, 1))                   # (K, c_out, c_in)
        else:
            co, ci, k = wf.shape                               # tap-major, ch-minor
            w = jnp.transpose(wf, (0, 2, 1)).reshape(co, k * ci)
            if i == 0 and fuse_residual:
                # Stack the 1x1 residual conv under stage 1: rows nonzero only in
                # the d=0 tap's column block, so one MXU push yields both the
                # stage-1 activations and the residual.
                pad_left = (ksize - 1) // 2
                wr_emb = jnp.zeros_like(w)
                wr_emb = wr_emb.at[:, pad_left * ci:(pad_left + 1) * ci].set(wr2d)
                w = jnp.concatenate([w, wr_emb], axis=0)
                tf = jnp.concatenate([tf, tr], axis=0)
        params += [w.astype(compute_dtype), tf]
    if not fuse_residual:
        params += [wr2d.astype(compute_dtype), tr]

    kernel = _make_kernel(stage_defs, fuse_residual, c_out_p, tile, l_pad, L)

    def full_spec(a):
        nd = a.ndim
        return pl.BlockSpec(a.shape, lambda g, _n=nd: (0,) * _n)

    # TODO(synk): weights/shifts are grid-constant; pl.Buffered(1) on their specs
    # would recover their second VMEM buffer (only matters on 64 MiB v7x).
    out2d = pl.pallas_call(
        kernel,
        out_shape=jax.ShapeDtypeStruct((c_out_p, n_pad * l_pad), out_dtype),
        grid_spec=pltpu.PrefetchScalarGridSpec(
            num_scalar_prefetch=0,
            grid=(num_steps,),
            in_specs=[pl.BlockSpec((c_in_p, tile), lambda g: (0, g))]
                     + [full_spec(p) for p in params],
            out_specs=pl.BlockSpec((c_out_p, tile), lambda g: (0, g)),
        ),
        compiler_params=pltpu.CompilerParams(
            dimension_semantics=("parallel",),
            vmem_limit_bytes=int(vmem_bytes * 0.85)),
    )(x2d, *params)

    out = out2d.reshape(c_out_p, n_pad, l_pad)[:c_out, :N, :L]
    return jnp.transpose(out, (1, 0, 2))                 # back to (N, C_out, L)


# ---------------- deterministic parameter init + pure-JAX reference ----------------

def _init_conv_bn(key, c_in, c_out, ksz):
    kw, kb, kg, kbe, km, kv = jax.random.split(key, 6)
    fan_in = c_in * ksz
    return dict(
        w=jax.random.normal(kw, (c_out, c_in, ksz), jnp.float32) / np.sqrt(fan_in),
        b=0.1 * jax.random.normal(kb, (c_out,), jnp.float32),
        gamma=jax.random.uniform(kg, (c_out,), jnp.float32, minval=0.5, maxval=1.5),
        beta=0.1 * jax.random.normal(kbe, (c_out,), jnp.float32),
        mean=0.1 * jax.random.normal(km, (c_out,), jnp.float32),
        var=jax.random.uniform(kv, (c_out,), jnp.float32, minval=0.5, maxval=1.5),
    )


def init_params(key, c_in, c_out):
    chans = [c_in, c_out, c_out, c_out]
    keys = jax.random.split(key, len(KERNEL_SIZES) + 1)
    layers = [_init_conv_bn(keys[i], chans[i], chans[i + 1], k)
              for i, k in enumerate(KERNEL_SIZES)]
    residual = _init_conv_bn(keys[-1], c_in, c_out, 1)
    return layers, residual


def reference_forward(x, layers, residual, eps=BN_EPS):
    def conv_bn(h, layer, ksz, relu):
        pad_left = (ksz - 1) // 2
        pad_right = (ksz - 1) - pad_left
        y = jax.lax.conv_general_dilated(
            h, layer["w"], window_strides=(1,), padding=[(pad_left, pad_right)],
            dimension_numbers=("NCH", "OIH", "NCH"))
        y = y + layer["b"][None, :, None]
        y = (y - layer["mean"][None, :, None]) * (
            layer["gamma"] / jnp.sqrt(layer["var"] + eps))[None, :, None]
        y = y + layer["beta"][None, :, None]
        return jnp.maximum(y, 0.0) if relu else y

    h = x
    for layer, ksz in zip(layers, KERNEL_SIZES):
        h = conv_bn(h, layer, ksz, relu=True)
    return h + conv_bn(x, residual, 1, relu=False)


if __name__ == "__main__":
    N, C_IN, C_OUT, L = 2, 4, 8, 128   # in_channels != out_channels -> residual active
    key = jax.random.PRNGKey(0)
    kx, kp = jax.random.split(key)
    x = jax.random.normal(kx, (N, C_IN, L), jnp.float32)
    layers, residual = init_params(kp, C_IN, C_OUT)

    ref = reference_forward(x, layers, residual)

    # Exact-semantics check: f32 operands/output, im2col path, fused residual.
    out_f32 = jax.block_until_ready(
        resnet_block_forward(x, layers, residual, compute_dtype=jnp.float32))
    assert out_f32.shape == (N, C_OUT, L)
    np.testing.assert_allclose(np.asarray(out_f32), np.asarray(ref),
                               rtol=2e-3, atol=2e-3)

    # Per-tap accumulating-dot path (normally used when channels >= 128),
    # exercised here by forcing the threshold down; separate residual matmul.
    out_taps = jax.block_until_ready(
        resnet_block_forward(x, layers, residual, compute_dtype=jnp.float32,
                             tap_dot_threshold=1))
    assert out_taps.shape == (N, C_OUT, L)
    np.testing.assert_allclose(np.asarray(out_taps), np.asarray(ref),
                               rtol=2e-3, atol=2e-3)

    # Default fast path: bf16 operands, f32 accumulation, bf16 output (looser
    # tolerance accounts for bf16 operand + output rounding vs the f32 reference).
    out_bf16 = jax.block_until_ready(resnet_block_forward(x, layers, residual))
    assert out_bf16.shape == (N, C_OUT, L)
    assert out_bf16.dtype == jnp.bfloat16
    np.testing.assert_allclose(np.asarray(out_bf16.astype(jnp.float32)),
                               np.asarray(ref), rtol=5e-2, atol=5e-2)

    print("KERNEL_OK")
</pallas_src>

<mosaic_0001>
module attributes {stable_mosaic.version = 11 : i64} {
  func.func @kernel(%arg0: i32, %arg1: memref<8x256xf32, #tpu.memory_space<vmem>>, %arg2: memref<16x64xf32, #tpu.memory_space<vmem>>, %arg3: memref<16x1xf32, #tpu.memory_space<vmem>>, %arg4: memref<8x40xf32, #tpu.memory_space<vmem>>, %arg5: memref<8x1xf32, #tpu.memory_space<vmem>>, %arg6: memref<8x24xf32, #tpu.memory_space<vmem>>, %arg7: memref<8x1xf32, #tpu.memory_space<vmem>>, %arg8: memref<8x256xf32, #tpu.memory_space<vmem>>) attributes {dimension_semantics = [#tpu.dimension_semantics<parallel>], iteration_bounds = array<i64: 1>, scalar_prefetch = 0 : i64, scratch_operands = 0 : i64, tpu.core_type = #tpu.core_type<tc>, window_params = [{transform_indices = @transform_0, window_bounds = array<i64: 8, 256>}, {pipeline_mode = #tpu.pipeline_mode<synchronous>, transform_indices = @transform_1, window_bounds = array<i64: 16, 64>}, {pipeline_mode = #tpu.pipeline_mode<synchronous>, transform_indices = @transform_2, window_bounds = array<i64: 16, 1>}, {pipeline_mode = #tpu.pipeline_mode<synchronous>, transform_indices = @transform_3, window_bounds = array<i64: 8, 40>}, {pipeline_mode = #tpu.pipeline_mode<synchronous>, transform_indices = @transform_4, window_bounds = array<i64: 8, 1>}, {pipeline_mode = #tpu.pipeline_mode<synchronous>, transform_indices = @transform_5, window_bounds = array<i64: 8, 24>}, {pipeline_mode = #tpu.pipeline_mode<synchronous>, transform_indices = @transform_6, window_bounds = array<i64: 8, 1>}, {transform_indices = @transform_7, window_bounds = array<i64: 8, 256>}]} {
    %0 = tpu.iota {dimensions = array<i32: 1>} : vector<1x256xi32>
    %c128_i32 = arith.constant 128 : i32
    %c0_i32 = arith.constant 0 : i32
    %1 = arith.cmpi eq, %c128_i32, %c0_i32 : i32
    %c1_i32 = arith.constant 1 : i32
    %2 = arith.select %1, %c1_i32, %c128_i32 : i32
    %3 = vector.broadcast %2 : i32 to vector<1x256xi32>
    %4 = arith.remsi %0, %3 : vector<1x256xi32>
    %c0_i32_0 = arith.constant 0 : i32
    %5 = vector.broadcast %c0_i32_0 : i32 to vector<1x256xi32>
    %6 = arith.cmpi ne, %4, %5 : vector<1x256xi32>
    %c0_i32_1 = arith.constant 0 : i32
    %7 = vector.broadcast %c0_i32_1 : i32 to vector<1x256xi32>
    %8 = arith.cmpi slt, %4, %7 : vector<1x256xi32>
    %c0_i32_2 = arith.constant 0 : i32
    %9 = arith.cmpi slt, %2, %c0_i32_2 : i32
    %10 = vector.broadcast %9 : i1 to vector<1x256xi1>
    %11 = vector.broadcast %10 : vector<1x256xi1> to vector<1x256xi1>
    %12 = arith.xori %8, %11 : vector<1x256xi1>
    %13 = arith.andi %12, %6 : vector<1x256xi1>
    %14 = vector.broadcast %2 : i32 to vector<1x256xi32>
    %15 = arith.addi %4, %14 : vector<1x256xi32>
    %16 = arith.select %13, %15, %4 : vector<1x256xi1>, vector<1x256xi32>
    %c3_i32 = arith.constant 3 : i32
    %17 = vector.broadcast %c3_i32 : i32 to vector<1x256xi32>
    %18 = arith.cmpi sge, %16, %17 : vector<1x256xi32>
    %19 = arith.extui %18 : vector<1x256xi1> to vector<1x256xi32>
    %20 = arith.sitofp %19 : vector<1x256xi32> to vector<1x256xf32>
    %c2_i32 = arith.constant 2 : i32
    %21 = vector.broadcast %c2_i32 : i32 to vector<1x256xi32>
    %22 = arith.cmpi sge, %16, %21 : vector<1x256xi32>
    %23 = arith.extui %22 : vector<1x256xi1> to vector<1x256xi32>
    %24 = arith.sitofp %23 : vector<1x256xi32> to vector<1x256xf32>
    %c1_i32_3 = arith.constant 1 : i32
    %25 = vector.broadcast %c1_i32_3 : i32 to vector<1x256xi32>
    %26 = arith.cmpi sge, %16, %25 : vector<1x256xi32>
    %27 = arith.extui %26 : vector<1x256xi1> to vector<1x256xi32>
    %28 = arith.sitofp %27 : vector<1x256xi32> to vector<1x256xf32>
    %c127_i32 = arith.constant 127 : i32
    %29 = vector.broadcast %c127_i32 : i32 to vector<1x256xi32>
    %30 = arith.cmpi slt, %16, %29 : vector<1x256xi32>
    %31 = arith.extui %30 : vector<1x256xi1> to vector<1x256xi32>
    %32 = arith.sitofp %31 : vector<1x256xi32> to vector<1x256xf32>
    %c126_i32 = arith.constant 126 : i32
    %33 = vector.broadcast %c126_i32 : i32 to vector<1x256xi32>
    %34 = arith.cmpi slt, %16, %33 : vector<1x256xi32>
    %35 = arith.extui %34 : vector<1x256xi1> to vector<1x256xi32>
    %36 = arith.sitofp %35 : vector<1x256xi32> to vector<1x256xf32>
    %c125_i32 = arith.constant 125 : i32
    %37 = vector.broadcast %c125_i32 : i32 to vector<1x256xi32>
    %38 = arith.cmpi slt, %16, %37 : vector<1x256xi32>
    %39 = arith.extui %38 : vector<1x256xi1> to vector<1x256xi32>
    %40 = arith.sitofp %39 : vector<1x256xi32> to vector<1x256xf32>
    %c124_i32 = arith.constant 124 : i32
    %41 = vector.broadcast %c124_i32 : i32 to vector<1x256xi32>
    %42 = arith.cmpi slt, %16, %41 : vector<1x256xi32>
    %43 = arith.extui %42 : vector<1x256xi1> to vector<1x256xi32>
    %44 = arith.sitofp %43 : vector<1x256xi32> to vector<1x256xf32>
    %c0 = arith.constant 0 : index
    %c0_4 = arith.constant 0 : index
    %45 = vector.load %arg1[%c0, %c0_4] : memref<8x256xf32, #tpu.memory_space<vmem>>, vector<8x256xf32>
    %c3_i32_5 = arith.constant 3 : i32
    %46 = tpu.dynamic_rotate %45 by %c3_i32_5 dim 1 : vector<8x256xf32>, i32 -> vector<8x256xf32>
    %47 = vector.broadcast %20 : vector<1x256xf32> to vector<8x256xf32>
    %48 = arith.mulf %46, %47 : vector<8x256xf32>
    %c2_i32_6 = arith.constant 2 : i32
    %49 = tpu.dynamic_rotate %45 by %c2_i32_6 dim 1 : vector<8x256xf32>, i32 -> vector<8x256xf32>
    %50 = vector.broadcast %24 : vector<1x256xf32> to vector<8x256xf32>
    %51 = arith.mulf %49, %50 : vector<8x256xf32>
    %c1_i32_7 = arith.constant 1 : i32
    %52 = tpu.dynamic_rotate %45 by %c1_i32_7 dim 1 : vector<8x256xf32>, i32 -> vector<8x256xf32>
    %53 = vector.broadcast %28 : vector<1x256xf32> to vector<8x256xf32>
    %54 = arith.mulf %52, %53 : vector<8x256xf32>
    %c255_i32 = arith.constant 255 : i32
    %55 = tpu.dynamic_rotate %45 by %c255_i32 dim 1 : vector<8x256xf32>, i32 -> vector<8x256xf32>
    %56 = vector.broadcast %32 : vector<1x256xf32> to vector<8x256xf32>
    %57 = arith.mulf %55, %56 : vector<8x256xf32>
    %c254_i32 = arith.constant 254 : i32
    %58 = tpu.dynamic_rotate %45 by %c254_i32 dim 1 : vector<8x256xf32>, i32 -> vector<8x256xf32>
    %59 = vector.broadcast %36 : vector<1x256xf32> to vector<8x256xf32>
    %60 = arith.mulf %58, %59 : vector<8x256xf32>
    %c253_i32 = arith.constant 253 : i32
    %61 = tpu.dynamic_rotate %45 by %c253_i32 dim 1 : vector<8x256xf32>, i32 -> vector<8x256xf32>
    %62 = vector.broadcast %40 : vector<1x256xf32> to vector<8x256xf32>
    %63 = arith.mulf %61, %62 : vector<8x256xf32>
    %c252_i32 = arith.constant 252 : i32
    %64 = tpu.dynamic_rotate %45 by %c252_i32 dim 1 : vector<8x256xf32>, i32 -> vector<8x256xf32>
    %65 = vector.broadcast %44 : vector<1x256xf32> to vector<8x256xf32>
    %66 = arith.mulf %64, %65 : vector<8x256xf32>
    %67 = tpu.concatenate %48, %51, %54, %45, %57, %60, %63, %66 in 0 : vector<8x256xf32>, vector<8x256xf32>, vector<8x256xf32>, vector<8x256xf32>, vector<8x256xf32>, vector<8x256xf32>, vector<8x256xf32>, vector<8x256xf32> -> vector<64x256xf32>
    %c0_8 = arith.constant 0 : index
    %c0_9 = arith.constant 0 : index
    %68 = vector.load %arg2[%c0_8, %c0_9] : memref<16x64xf32, #tpu.memory_space<vmem>>, vector<16x64xf32>
    %cst = arith.constant dense<0.000000e+00> : vector<16x256xf32>
    %69 = tpu.matmul %68, %67, %cst {dimension_numbers = #tpu.dot_dimension_numbers<[1], [0], [0], [1], [0, 0, 1, 1], [], []>} : vector<16x64xf32>, vector<64x256xf32>, vector<16x256xf32> -> vector<16x256xf32>
    %c0_10 = arith.constant 0 : index
    %c0_11 = arith.constant 0 : index
    %70 = vector.load %arg3[%c0_10, %c0_11] : memref<16x1xf32, #tpu.memory_space<vmem>>, vector<16x1xf32>
    %71 = vector.broadcast %70 : vector<16x1xf32> to vector<16x256xf32>
    %72 = arith.addf %69, %71 : vector<16x256xf32>
    %73 = vector.extract_strided_slice %72 {offsets = [0, 0], sizes = [8, 256], strides = [1, 1]} : vector<16x256xf32> to vector<8x256xf32>
    %cst_12 = arith.constant 0.000000e+00 : f32
    %74 = vector.broadcast %cst_12 : f32 to vector<8x256xf32>
    %75 = arith.maximumf %73, %74 : vector<8x256xf32>
    %76 = vector.extract_strided_slice %72 {offsets = [8, 0], sizes = [8, 256], strides = [1, 1]} : vector<16x256xf32> to vector<8x256xf32>
    %c2_i32_13 = arith.constant 2 : i32
    %77 = tpu.dynamic_rotate %75 by %c2_i32_13 dim 1 : vector<8x256xf32>, i32 -> vector<8x256xf32>
    %78 = vector.broadcast %24 : vector<1x256xf32> to vector<8x256xf32>
    %79 = arith.mulf %77, %78 : vector<8x256xf32>
    %c1_i32_14 = arith.constant 1 : i32
    %80 = tpu.dynamic_rotate %75 by %c1_i32_14 dim 1 : vector<8x256xf32>, i32 -> vector<8x256xf32>
    %81 = vector.broadcast %28 : vector<1x256xf32> to vector<8x256xf32>
    %82 = arith.mulf %80, %81 : vector<8x256xf32>
    %c255_i32_15 = arith.constant 255 : i32
    %83 = tpu.dynamic_rotate %75 by %c255_i32_15 dim 1 : vector<8x256xf32>, i32 -> vector<8x256xf32>
    %84 = vector.broadcast %32 : vector<1x256xf32> to vector<8x256xf32>
    %85 = arith.mulf %83, %84 : vector<8x256xf32>
    %c254_i32_16 = arith.constant 254 : i32
    %86 = tpu.dynamic_rotate %75 by %c254_i32_16 dim 1 : vector<8x256xf32>, i32 -> vector<8x256xf32>
    %87 = vector.broadcast %36 : vector<1x256xf32> to vector<8x256xf32>
    %88 = arith.mulf %86, %87 : vector<8x256xf32>
    %89 = tpu.concatenate %79, %82, %75, %85, %88 in 0 : vector<8x256xf32>, vector<8x256xf32>, vector<8x256xf32>, vector<8x256xf32>, vector<8x256xf32> -> vector<40x256xf32>
    %c0_17 = arith.constant 0 : index
    %c0_18 = arith.constant 0 : index
    %90 = vector.load %arg4[%c0_17, %c0_18] : memref<8x40xf32, #tpu.memory_space<vmem>>, vector<8x40xf32>
    %cst_19 = arith.constant dense<0.000000e+00> : vector<8x256xf32>
    %91 = tpu.matmul %90, %89, %cst_19 {dimension_numbers = #tpu.dot_dimension_numbers<[1], [0], [0], [1], [0, 0, 1, 1], [], []>} : vector<8x40xf32>, vector<40x256xf32>, vector<8x256xf32> -> vector<8x256xf32>
    %c0_20 = arith.constant 0 : index
    %c0_21 = arith.constant 0 : index
    %92 = vector.load %arg5[%c0_20, %c0_21] : memref<8x1xf32, #tpu.memory_space<vmem>>, vector<8x1xf32>
    %93 = vector.broadcast %92 : vector<8x1xf32> to vector<8x256xf32>
    %94 = arith.addf %91, %93 : vector<8x256xf32>
    %cst_22 = arith.constant 0.000000e+00 : f32
    %95 = vector.broadcast %cst_22 : f32 to vector<8x256xf32>
    %96 = arith.maximumf %94, %95 : vector<8x256xf32>
    %c1_i32_23 = arith.constant 1 : i32
    %97 = tpu.dynamic_rotate %96 by %c1_i32_23 dim 1 : vector<8x256xf32>, i32 -> vector<8x256xf32>
    %98 = vector.broadcast %28 : vector<1x256xf32> to vector<8x256xf32>
    %99 = arith.mulf %97, %98 : vector<8x256xf32>
    %c255_i32_24 = arith.constant 255 : i32
    %100 = tpu.dynamic_rotate %96 by %c255_i32_24 dim 1 : vector<8x256xf32>, i32 -> vector<8x256xf32>
    %101 = vector.broadcast %32 : vector<1x256xf32> to vector<8x256xf32>
    %102 = arith.mulf %100, %101 : vector<8x256xf32>
    %103 = tpu.concatenate %99, %96, %102 in 0 : vector<8x256xf32>, vector<8x256xf32>, vector<8x256xf32> -> vector<24x256xf32>
    %c0_25 = arith.constant 0 : index
    %c0_26 = arith.constant 0 : index
    %104 = vector.load %arg6[%c0_25, %c0_26] : memref<8x24xf32, #tpu.memory_space<vmem>>, vector<8x24xf32>
    %cst_27 = arith.constant dense<0.000000e+00> : vector<8x256xf32>
    %105 = tpu.matmul %104, %103, %cst_27 {dimension_numbers = #tpu.dot_dimension_numbers<[1], [0], [0], [1], [0, 0, 1, 1], [], []>} : vector<8x24xf32>, vector<24x256xf32>, vector<8x256xf32> -> vector<8x256xf32>
    %c0_28 = arith.constant 0 : index
    %c0_29 = arith.constant 0 : index
    %106 = vector.load %arg7[%c0_28, %c0_29] : memref<8x1xf32, #tpu.memory_space<vmem>>, vector<8x1xf32>
    %107 = vector.broadcast %106 : vector<8x1xf32> to vector<8x256xf32>
    %108 = arith.addf %105, %107 : vector<8x256xf32>
    %cst_30 = arith.constant 0.000000e+00 : f32
    %109 = vector.broadcast %cst_30 : f32 to vector<8x256xf32>
    %110 = arith.maximumf %108, %109 : vector<8x256xf32>
    %111 = arith.addf %110, %76 : vector<8x256xf32>
    %c0_31 = arith.constant 0 : index
    %c0_32 = arith.constant 0 : index
    %112 = vector.load %arg8[%c0_31, %c0_32] : memref<8x256xf32, #tpu.memory_space<vmem>>, vector<8x256xf32>
    tpu.vector_store %arg8[%c0_31, %c0_32], %111 {strides = array<i32>} : memref<8x256xf32, #tpu.memory_space<vmem>>, vector<8x256xf32>,
    return
  }
  func.func @transform_0(%arg0: i32) -> (i32, i32) {
    %c0_i32 = arith.constant 0 : i32
    %c0_i32_0 = arith.constant 0 : i32
    return %c0_i32, %arg0 : i32, i32
  }
  func.func @transform_1(%arg0: i32) -> (i32, i32) {
    %c0_i32 = arith.constant 0 : i32
    %c0_i32_0 = arith.constant 0 : i32
    %c0_i32_1 = arith.constant 0 : i32
    return %c0_i32, %c0_i32_0 : i32, i32
  }
  func.func @transform_2(%arg0: i32) -> (i32, i32) {
    %c0_i32 = arith.constant 0 : i32
    %c0_i32_0 = arith.constant 0 : i32
    %c0_i32_1 = arith.constant 0 : i32
    return %c0_i32, %c0_i32_0 : i32, i32
  }
  func.func @transform_3(%arg0: i32) -> (i32, i32) {
    %c0_i32 = arith.constant 0 : i32
    %c0_i32_0 = arith.constant 0 : i32
    %c0_i32_1 = arith.constant 0 : i32
    return %c0_i32, %c0_i32_0 : i32, i32
  }
  func.func @transform_4(%arg0: i32) -> (i32, i32) {
    %c0_i32 = arith.constant 0 : i32
    %c0_i32_0 = arith.constant 0 : i32
    %c0_i32_1 = arith.constant 0 : i32
    return %c0_i32, %c0_i32_0 : i32, i32
  }
  func.func @transform_5(%arg0: i32) -> (i32, i32) {
    %c0_i32 = arith.constant 0 : i32
    %c0_i32_0 = arith.constant 0 : i32
    %c0_i32_1 = arith.constant 0 : i32
    return %c0_i32, %c0_i32_0 : i32, i32
  }
  func.func @transform_6(%arg0: i32) -> (i32, i32) {
    %c0_i32 = arith.constant 0 : i32
    %c0_i32_0 = arith.constant 0 : i32
    %c0_i32_1 = arith.constant 0 : i32
    return %c0_i32, %c0_i32_0 : i32, i32
  }
  func.func @transform_7(%arg0: i32) -> (i32, i32) {
    %c0_i32 = arith.constant 0 : i32
    %c0_i32_0 = arith.constant 0 : i32
    return %c0_i32, %arg0 : i32, i32
  }
}

</mosaic_0001>

<llo_original>
// kernel: resnet_block_forward.1
$region0: #{resnet_block_forward.1}
  #allocation0 [shape = 'u32[]', space=smem, size = 0x4, offset = 0x4, fixed_abs, tag = 'smem constant byte address 0x4 - core index']
  #allocation1 [shape = 'u32[144,128]{1,0:T(1,128)}', space=vmem, size = 0x12000, scoped, tag = 'internal scratch']
  %s0 = inlined_call_operand.vmem [shape: f32[8,256], index: 0, kind: input, shape index: {}]
  %s1 = inlined_call_operand.vmem [shape: f32[16,64], index: 1, kind: input, shape index: {}]
  %s2 = inlined_call_operand.vmem [shape: f32[16,1], index: 2, kind: input, shape index: {}]
  %s3 = inlined_call_operand.vmem [shape: f32[8,40], index: 3, kind: input, shape index: {}]
  %s4 = inlined_call_operand.vmem [shape: f32[8,1], index: 4, kind: input, shape index: {}]
  %s5 = inlined_call_operand.vmem [shape: f32[8,24], index: 5, kind: input, shape index: {}]
  %s6 = inlined_call_operand.vmem [shape: f32[8,1], index: 6, kind: input, shape index: {}]
  %s7 = inlined_call_operand.hbm [shape: f32[8,256], index: 7, kind: output, shape index: {}]
  %s8 = sld [smem:[#allocation0]]
  $region38: #{resnet_block_forward.1} parent=0
    _
  %s10 = ssub.s32 1, %s8
  %s11 = scalar_select 0, %s10, %s8
  $region1: #{resnet_block_forward.1} parent=0
    #allocation2 [shape = 'u8[8192]{0}', space=vmem, size = 0x2000, scoped, tag = 'output window, operand 0, single buffered']
    #allocation3 [shape = 's32[1]{0}', space=sflag, size = 0x4, scoped, tag = 'scoped memory for resnet_block_forward.1']
    %12 = vsyncpa [#allocation3], 0
    // Predicated region
    $region2: #{resnet_block_forward.1} parent=1 // pred_check
      _
    $region3: #{resnet_block_forward.1} parent=1 // pred_check_branch
      %14 = sbr.rel (0) target = $region5
    $region4: #{resnet_block_forward.1} parent=1 // pred_region
      _
    $region5: #{resnet_block_forward.1} parent=1 // pred_fallthru
      _
    // Predicated region
    $region6: #{resnet_block_forward.1} parent=1 // pred_check
      _
    $region7: #{resnet_block_forward.1} parent=1 // pred_check_branch
      %16 = sbr.rel (0) target = $region9
    $region8: #{resnet_block_forward.1} parent=1 // pred_region
      _
    $region9: #{resnet_block_forward.1} parent=1 // pred_fallthru
      _
    // Predicated region
    $region10: #{resnet_block_forward.1} parent=1 // pred_check
      _
    $region11: #{resnet_block_forward.1} parent=1 // pred_check_branch
      %18 = sbr.rel (0) target = $region13
    $region12: #{resnet_block_forward.1} parent=1 // pred_region
      _
    $region13: #{resnet_block_forward.1} parent=1 // pred_fallthru
      _
    // Predicated region
    $region14: #{resnet_block_forward.1} parent=1 // pred_check
      _
    $region15: #{resnet_block_forward.1} parent=1 // pred_check_branch
      %20 = sbr.rel (0) target = $region17
    $region16: #{resnet_block_forward.1} parent=1 // pred_region
      _
    $region17: #{resnet_block_forward.1} parent=1 // pred_fallthru
      _
    // Predicated region
    $region18: #{resnet_block_forward.1} parent=1 // pred_check
      _
    $region19: #{resnet_block_forward.1} parent=1 // pred_check_branch
      %22 = sbr.rel (0) target = $region21
    $region20: #{resnet_block_forward.1} parent=1 // pred_region
      _
    $region21: #{resnet_block_forward.1} parent=1 // pred_fallthru
      _
    // Predicated region
    $region22: #{resnet_block_forward.1} parent=1 // pred_check
      _
    $region23: #{resnet_block_forward.1} parent=1 // pred_check_branch
      %24 = sbr.rel (0) target = $region25
    $region24: #{resnet_block_forward.1} parent=1 // pred_region
      _
    $region25: #{resnet_block_forward.1} parent=1 // pred_fallthru
      _
    // Predicated region
    $region26: #{resnet_block_forward.1} parent=1 // pred_check
      _
    $region27: #{resnet_block_forward.1} parent=1 // pred_check_branch
      %26 = sbr.rel (0) target = $region29
    $region28: #{resnet_block_forward.1} parent=1 // pred_region
      _
    $region29: #{resnet_block_forward.1} parent=1 // pred_fallthru
      _
    %v27 = vlaneseq
    %v28 = vand.u32 %v27, 127
    %v29 = vadd.s32 %v28, 128
    %vm30 = vcmp.lt.s32.totalorder %v28, 0
    %v31 = vsub.s32 0, %v28
    %v32 = vsel %vm30, %v31, %v28
    %v33 = vshrl.u32 %v32, 7
    %v34 = vand.u32 %v32, 127
    %v35 = vsub.s32 0, %v34
    %v36 = vsel %vm30, %v35, %v34
    %vm37 = vcmp.lt.s32.totalorder %v29, 0
    %v38 = vsub.s32 0, %v29
    %v39 = vsel %vm37, %v38, %v29
    %v40 = vshrl.u32 %v39, 7
    %v41 = vand.u32 %v39, 127
    %v42 = vsub.s32 0, %v41
    %v43 = vsel %vm37, %v42, %v41
    %vm44 = vcmp.ne.s32.totalorder %v36, 0
    %vm45 = vcmp.ne.s32.totalorder %v43, 0
    %vm46 = vcmp.lt.s32.totalorder %v36, 0
    %vm47 = vcmp.lt.s32.totalorder %v43, 0
    %vm48 = vmand %vm46, %vm44
    %vm49 = vmand %vm47, %vm45
    %v50 = vadd.s32 %v36, 128
    %v51 = vadd.s32 %v43, 128
    %v52 = vsel %vm48, %v50, %v36
    %v53 = vsel %vm49, %v51, %v43
    %vm54 = vcmp.ge.s32.totalorder %v52, 3
    %vm55 = vcmp.ge.s32.totalorder %v53, 3
    %v56 = vsel %vm54, 1, 0
    %v57 = vsel %vm55, 1, 0
    %v58 = vcvt.s32.f32 %v56
    %v59 = vcvt.s32.f32 %v57
    %vm60 = vcmp.ge.s32.totalorder %v52, 2
    %vm61 = vcmp.ge.s32.totalorder %v53, 2
    %v62 = vsel %vm60, 1, 0
    %v63 = vsel %vm61, 1, 0
    %v64 = vcvt.s32.f32 %v62
    %v65 = vcvt.s32.f32 %v63
    %vm66 = vcmp.ge.s32.totalorder %v52, 1
    %vm67 = vcmp.ge.s32.totalorder %v53, 1
    %v68 = vsel %vm66, 1, 0
    %v69 = vsel %vm67, 1, 0
    %v70 = vcvt.s32.f32 %v68
    %v71 = vcvt.s32.f32 %v69
    %vm72 = vcmp.lt.s32.totalorder %v52, 127
    %vm73 = vcmp.lt.s32.totalorder %v53, 127
    %v74 = vsel %vm72, 1, 0
    %v75 = vsel %vm73, 1, 0
    %v76 = vcvt.s32.f32 %v74
    %v77 = vcvt.s32.f32 %v75
    %vm78 = vcmp.lt.s32.totalorder %v52, 126
    %vm79 = vcmp.lt.s32.totalorder %v53, 126
    %v80 = vsel %vm78, 1, 0
    %v81 = vsel %vm79, 1, 0
    %v82 = vcvt.s32.f32 %v80
    %v83 = vcvt.s32.f32 %v81
    %vm84 = vcmp.lt.s32.totalorder %v52, 125
    %vm85 = vcmp.lt.s32.totalorder %v53, 125
    %v86 = vsel %vm84, 1, 0
    %v87 = vsel %vm85, 1, 0
    %v88 = vcvt.s32.f32 %v86
    %v89 = vcvt.s32.f32 %v87
    %vm90 = vcmp.lt.s32.totalorder %v52, 124
    %vm91 = vcmp.lt.s32.totalorder %v53, 124
    %v92 = vsel %vm90, 1, 0
    %v93 = vsel %vm91, 1, 0
    %v94 = vcvt.s32.f32 %v92
    %v95 = vcvt.s32.f32 %v93
    %v96 = vld [vmem:[%s0] sm:$0xff]
    %v97 = vld [vmem:[%s0 + $0x8] sm:$0xff]
    %98 = vrot.lane.b32.xlu0 %v96, 3
    %v99 = vpop.permute.xlu0 %98
    %100 = vrot.lane.b32.xlu0 %v97, 3
    %v101 = vpop.permute.xlu0 %100
    %vm102 = vcmp.lt.s32.totalorder %v28, 3
    %v103 = vsel %vm102, %v99, %v101
    %v104 = vsel %vm102, %v101, %v99
    %v105 = vmul.f32 %v104, %v58
    %v106 = vmul.f32 %v103, %v59
    %107 = vrot.lane.b32.xlu0 %v96, 2
    %v108 = vpop.permute.xlu0 %107
    %109 = vrot.lane.b32.xlu0 %v97, 2
    %v110 = vpop.permute.xlu0 %109
    %vm111 = vcmp.lt.s32.totalorder %v28, 2
    %v112 = vsel %vm111, %v108, %v110
    %v113 = vsel %vm111, %v110, %v108
    %v114 = vmul.f32 %v113, %v64
    %v115 = vmul.f32 %v112, %v65
    %116 = vrot.lane.b32.xlu0 %v96, 1
    %v117 = vpop.permute.xlu0 %116
    %118 = vrot.lane.b32.xlu0 %v97, 1
    %v119 = vpop.permute.xlu0 %118
    %vm120 = vcmp.lt.s32.totalorder %v28, 1
    %v121 = vsel %vm120, %v117, %v119
    %v122 = vsel %vm120, %v119, %v117
    %v123 = vmul.f32 %v122, %v70
    %v124 = vmul.f32 %v121, %v71
    %125 = vrot.lane.b32.xlu0 %v96, 127
    %v126 = vpop.permute.xlu0 %125
    %127 = vrot.lane.b32.xlu0 %v97, 127
    %v128 = vpop.permute.xlu0 %127
    %vm129 = vcmp.lt.s32.totalorder %v28, 127
    %v130 = vsel %vm129, %v126, %v128
    %v131 = vsel %vm129, %v128, %v126
    %v132 = vmul.f32 %v130, %v76
    %v133 = vmul.f32 %v131, %v77
    %134 = vrot.lane.b32.xlu0 %v96, 126
    %v135 = vpop.permute.xlu0 %134
    %136 = vrot.lane.b32.xlu0 %v97, 126
    %v137 = vpop.permute.xlu0 %136
    %vm138 = vcmp.lt.s32.totalorder %v28, 126
    %v139 = vsel %vm138, %v135, %v137
    %v140 = vsel %vm138, %v137, %v135
    %v141 = vmul.f32 %v139, %v82
    %v142 = vmul.f32 %v140, %v83
    %143 = vrot.lane.b32.xlu0 %v96, 125
    %v144 = vpop.permute.xlu0 %143
    %145 = vrot.lane.b32.xlu0 %v97, 125
    %v146 = vpop.permute.xlu0 %145
    %vm147 = vcmp.lt.s32.totalorder %v28, 125
    %v148 = vsel %vm147, %v144, %v146
    %v149 = vsel %vm147, %v146, %v144
    %v150 = vmul.f32 %v148, %v88
    %v151 = vmul.f32 %v149, %v89
    %152 = vrot.lane.b32.xlu0 %v96, 124
    %v153 = vpop.permute.xlu0 %152
    %154 = vrot.lane.b32.xlu0 %v97, 124
    %v155 = vpop.permute.xlu0 %154
    %vm156 = vcmp.lt.s32.totalorder %v28, 124
    %v157 = vsel %vm156, %v153, %v155
    %v158 = vsel %vm156, %v155, %v153
    %v159 = vmul.f32 %v157, %v94
    %v160 = vmul.f32 %v158, %v95
    %v161 = vld [vmem:[%s1] sm:$0xff]
    %v162 = vld [vmem:[%s1 + $0x8] sm:$0xff]
    %v163 = vld [vmem:[%s2] sm:$0xff]
    %v164 = vld [vmem:[%s2 + $0x8] sm:$0xff]
    %166 = vset.pattern.permute.xlu0 0
    %167 = vperm.xlu0 %166, %v163
    %v168 = vpop.permute.xlu0 %167
    %171 = vset.pattern.permute.xlu0 0
    %172 = vperm.xlu0 %171, %v164
    %v173 = vpop.permute.xlu0 %172
    %vm175 = vcmask 523264
    %v177 = vsel %vm175, %v161, 0
    %v180 = vsel %vm175, %v162, 0
    %182 = vmatprep.subr.mxu0 0.0
    %183 = vmatpush1.msra.mxu0 0.0
    %184 = vmatprep.subr.mxu0 0.0
    %185 = vmatpush1.msra.mxu0 0.0
    %186 = vmatprep.subr.mxu0 0.0
    %187 = vmatpush1.msra.mxu0 0.0
    %188 = vmatprep.subr.mxu0 0.0
    %189 = vmatpush1.msra.mxu0 0.0
    %190 = vmatprep.subr.mxu0 0.0
    %191 = vmatpush1.msra.mxu0 0.0
    %192 = vmatprep.subr.mxu0 0.0
    %193 = vmatpush1.msra.mxu0 0.0
    %194 = vmatprep.subr.mxu0 0.0
    %195 = vmatpush1.msra.mxu0 0.0
    %196 = vmatprep.subr.mxu0 0.0
    %197 = vmatpush1.msra.mxu0 0.0
    %198 = vmatprep.subr.mxu0 %v160
    %199 = vmatpush1.msra.mxu0 %v159
    %200 = vmatprep.subr.mxu0 %v151
    %201 = vmatpush1.msra.mxu0 %v150
    %202 = vmatprep.subr.mxu0 %v142
    %203 = vmatpush1.msra.mxu0 %v141
    %204 = vmatprep.subr.mxu0 %v133
    %205 = vmatpush1.msra.mxu0 %v132
    %206 = vmatprep.subr.mxu0 %v97
    %207 = vmatpush1.msra.mxu0 %v96
    %208 = vmatprep.subr.mxu0 %v124
    %209 = vmatpush1.msra.mxu0 %v123
    %210 = vmatprep.subr.mxu0 %v115
    %211 = vmatpush1.msra.mxu0 %v114
    %212 = vmatprep.subr.mxu0 %v106
    %213 = vmatpush1.msra.mxu0 %v105
    %214 = vmatprep.subr.mxu0 0.0
    %215 = vmatpush2.msra.mxu0 0.0
    %216 = vmatprep.subr.mxu0 0.0
    %217 = vmatpush2.msra.mxu0 0.0
    %218 = vmatprep.subr.mxu0 0.0
    %219 = vmatpush2.msra.mxu0 0.0
    %220 = vmatprep.subr.mxu0 0.0
    %221 = vmatpush2.msra.mxu0 0.0
    %222 = vmatprep.subr.mxu0 0.0
    %223 = vmatpush2.msra.mxu0 0.0
    %224 = vmatprep.subr.mxu0 0.0
    %225 = vmatpush2.msra.mxu0 0.0
    %226 = vmatprep.subr.mxu0 0.0
    %227 = vmatpush2.msra.mxu0 0.0
    %228 = vmatprep.subr.mxu0 0.0
    %229 = vmatpush2.msra.mxu0 0.0
    %230 = vmatprep.subr.mxu0 0.0
    %231 = vmatpush2.msra.mxu0 0.0
    %232 = vmatprep.subr.mxu0 0.0
    %233 = vmatpush2.msra.mxu0 0.0
    %234 = vmatprep.subr.mxu0 0.0
    %235 = vmatpush2.msra.mxu0 0.0
    %236 = vmatprep.subr.mxu0 0.0
    %237 = vmatpush2.msra.mxu0 0.0
    %238 = vmatprep.subr.mxu0 0.0
    %239 = vmatpush2.msra.mxu0 0.0
    %240 = vmatprep.subr.mxu0 0.0
    %241 = vmatpush2.msra.mxu0 0.0
    %242 = vmatprep.subr.mxu0 0.0
    %243 = vmatpush2.msra.mxu0 0.0
    %244 = vmatprep.subr.mxu0 0.0
    %245 = vmatpush2.msra.mxu0 0.0
    %246 = vmatprep.mubr.f32.mxu0 0.0
    %247 = vmatmul.mubr.f32.gmra.mxu0 %v177
    %v248 = vpop.f32.mrf.mxu0
    %v249 = vadd.f32 %v168, %v248
    %v250 = vpop.f32.mrf.mxu0
    %v251 = vadd.f32 %v168, %v250
    %252 = vmatprep.mubr.f32.mxu0 0.0
    %253 = vmatmul.mubr.f32.gmra.mxu0 %v180
    %v254 = vpop.f32.mrf.mxu0
    %v255 = vadd.f32 %v173, %v254
    %v256 = vpop.f32.mrf.mxu0
    %v257 = vadd.f32 %v173, %v256
    %258 = vdwg.mxu0
    %v259 = vmax.f32 %v249, 0.0
    %v260 = vmax.f32 %v251, 0.0
    %261 = vrot.lane.b32.xlu0 %v259, 2
    %v262 = vpop.permute.xlu0 %261
    %263 = vrot.lane.b32.xlu0 %v260, 2
    %v264 = vpop.permute.xlu0 %263
    %v265 = vsel %vm111, %v262, %v264
    %v266 = vsel %vm111, %v264, %v262
    %v267 = vmul.f32 %v266, %v64
    %v268 = vmul.f32 %v265, %v65
    %269 = vrot.lane.b32.xlu0 %v259, 1
    %v270 = vpop.permute.xlu0 %269
    %271 = vrot.lane.b32.xlu0 %v260, 1
    %v272 = vpop.permute.xlu0 %271
    %v273 = vsel %vm120, %v270, %v272
    %v274 = vsel %vm120, %v272, %v270
    %v275 = vmul.f32 %v274, %v70
    %v276 = vmul.f32 %v273, %v71
    %277 = vrot.lane.b32.xlu0 %v259, 127
    %v278 = vpop.permute.xlu0 %277
    %279 = vrot.lane.b32.xlu0 %v260, 127
    %v280 = vpop.permute.xlu0 %279
    %v281 = vsel %vm129, %v278, %v280
    %v282 = vsel %vm129, %v280, %v278
    %v283 = vmul.f32 %v281, %v76
    %v284 = vmul.f32 %v282, %v77
    %285 = vrot.lane.b32.xlu0 %v259, 126
    %v286 = vpop.permute.xlu0 %285
    %287 = vrot.lane.b32.xlu0 %v260, 126
    %v288 = vpop.permute.xlu0 %287
    %v289 = vsel %vm138, %v286, %v288
    %v290 = vsel %vm138, %v288, %v286
    %v291 = vmul.f32 %v289, %v82
    %v292 = vmul.f32 %v290, %v83
    %v293 = vld [vmem:[%s3] sm:$0xff]
    %v294 = vld [vmem:[%s4] sm:$0xff]
    %296 = vset.pattern.permute.xlu0 0
    %297 = vperm.xlu0 %296, %v294
    %v298 = vpop.permute.xlu0 %297
    %vm300 = vcmask 326656
    %v302 = vsel %vm300, %v293, 0
    %304 = vmatprep.subr.mxu0 0.0
    %305 = vmatpush1.msra.mxu0 0.0
    %306 = vmatprep.subr.mxu0 0.0
    %307 = vmatpush1.msra.mxu0 0.0
    %308 = vmatprep.subr.mxu0 0.0
    %309 = vmatpush1.msra.mxu0 0.0
    %310 = vmatprep.subr.mxu0 0.0
    %311 = vmatpush1.msra.mxu0 0.0
    %312 = vmatprep.subr.mxu0 0.0
    %313 = vmatpush1.msra.mxu0 0.0
    %314 = vmatprep.subr.mxu0 0.0
    %315 = vmatpush1.msra.mxu0 0.0
    %316 = vmatprep.subr.mxu0 0.0
    %317 = vmatpush1.msra.mxu0 0.0
    %318 = vmatprep.subr.mxu0 0.0
    %319 = vmatpush1.msra.mxu0 0.0
    %320 = vmatprep.subr.mxu0 0.0
    %321 = vmatpush1.msra.mxu0 0.0
    %322 = vmatprep.subr.mxu0 0.0
    %323 = vmatpush1.msra.mxu0 0.0
    %324 = vmatprep.subr.mxu0 0.0
    %325 = vmatpush1.msra.mxu0 0.0
    %326 = vmatprep.subr.mxu0 %v292
    %327 = vmatpush1.msra.mxu0 %v291
    %328 = vmatprep.subr.mxu0 %v284
    %329 = vmatpush1.msra.mxu0 %v283
    %330 = vmatprep.subr.mxu0 %v260
    %331 = vmatpush1.msra.mxu0 %v259
    %332 = vmatprep.subr.mxu0 %v276
    %333 = vmatpush1.msra.mxu0 %v275
    %334 = vmatprep.subr.mxu0 %v268
    %335 = vmatpush1.msra.mxu0 %v267
    %336 = vmatprep.subr.mxu0 0.0
    %337 = vmatpush2.msra.mxu0 0.0
    %338 = vmatprep.subr.mxu0 0.0
    %339 = vmatpush2.msra.mxu0 0.0
    %340 = vmatprep.subr.mxu0 0.0
    %341 = vmatpush2.msra.mxu0 0.0
    %342 = vmatprep.subr.mxu0 0.0
    %343 = vmatpush2.msra.mxu0 0.0
    %344 = vmatprep.subr.mxu0 0.0
    %345 = vmatpush2.msra.mxu0 0.0
    %346 = vmatprep.subr.mxu0 0.0
    %347 = vmatpush2.msra.mxu0 0.0
    %348 = vmatprep.subr.mxu0 0.0
    %349 = vmatpush2.msra.mxu0 0.0
    %350 = vmatprep.subr.mxu0 0.0
    %351 = vmatpush2.msra.mxu0 0.0
    %352 = vmatprep.subr.mxu0 0.0
    %353 = vmatpush2.msra.mxu0 0.0
    %354 = vmatprep.subr.mxu0 0.0
    %355 = vmatpush2.msra.mxu0 0.0
    %356 = vmatprep.subr.mxu0 0.0
    %357 = vmatpush2.msra.mxu0 0.0
    %358 = vmatprep.subr.mxu0 0.0
    %359 = vmatpush2.msra.mxu0 0.0
    %360 = vmatprep.subr.mxu0 0.0
    %361 = vmatpush2.msra.mxu0 0.0
    %362 = vmatprep.subr.mxu0 0.0
    %363 = vmatpush2.msra.mxu0 0.0
    %364 = vmatprep.subr.mxu0 0.0
    %365 = vmatpush2.msra.mxu0 0.0
    %366 = vmatprep.subr.mxu0 0.0
    %367 = vmatpush2.msra.mxu0 0.0
    %368 = vmatprep.mubr.f32.mxu0 0.0
    %369 = vmatmul.mubr.f32.gmra.mxu0 %v302
    %v370 = vpop.f32.mrf.mxu0
    %v371 = vadd.f32 %v298, %v370
    %v372 = vpop.f32.mrf.mxu0
    %v373 = vadd.f32 %v298, %v372
    %374 = vdwg.mxu0
    %v375 = vmax.f32 %v371, 0.0
    %v376 = vmax.f32 %v373, 0.0
    %377 = vrot.lane.b32.xlu0 %v375, 1
    %v378 = vpop.permute.xlu0 %377
    %379 = vrot.lane.b32.xlu0 %v376, 1
    %v380 = vpop.permute.xlu0 %379
    %v381 = vsel %vm120, %v378, %v380
    %v382 = vsel %vm120, %v380, %v378
    %v383 = vmul.f32 %v382, %v70
    %v384 = vmul.f32 %v381, %v71
    %385 = vrot.lane.b32.xlu0 %v375, 127
    %v386 = vpop.permute.xlu0 %385
    %387 = vrot.lane.b32.xlu0 %v376, 127
    %v388 = vpop.permute.xlu0 %387
    %v389 = vsel %vm129, %v386, %v388
    %v390 = vsel %vm129, %v388, %v386
    %v391 = vmul.f32 %v389, %v76
    %v392 = vmul.f32 %v390, %v77
    %v393 = vld [vmem:[%s5] sm:$0xff]
    %v394 = vld [vmem:[%s6] sm:$0xff]
    %396 = vset.pattern.permute.xlu0 0
    %397 = vperm.xlu0 %396, %v394
    %v398 = vpop.permute.xlu0 %397
    %vm400 = vcmask 195584
    %v402 = vsel %vm400, %v393, 0
    %404 = vmatprep.subr.mxu0 0.0
    %405 = vmatpush1.msra.mxu0 0.0
    %406 = vmatprep.subr.mxu0 0.0
    %407 = vmatpush1.msra.mxu0 0.0
    %408 = vmatprep.subr.mxu0 0.0
    %409 = vmatpush1.msra.mxu0 0.0
    %410 = vmatprep.subr.mxu0 0.0
    %411 = vmatpush1.msra.mxu0 0.0
    %412 = vmatprep.subr.mxu0 0.0
    %413 = vmatpush1.msra.mxu0 0.0
    %414 = vmatprep.subr.mxu0 0.0
    %415 = vmatpush1.msra.mxu0 0.0
    %416 = vmatprep.subr.mxu0 0.0
    %417 = vmatpush1.msra.mxu0 0.0
    %418 = vmatprep.subr.mxu0 0.0
    %419 = vmatpush1.msra.mxu0 0.0
    %420 = vmatprep.subr.mxu0 0.0
    %421 = vmatpush1.msra.mxu0 0.0
    %422 = vmatprep.subr.mxu0 0.0
    %423 = vmatpush1.msra.mxu0 0.0
    %424 = vmatprep.subr.mxu0 0.0
    %425 = vmatpush1.msra.mxu0 0.0
    %426 = vmatprep.subr.mxu0 0.0
    %427 = vmatpush1.msra.mxu0 0.0
    %428 = vmatprep.subr.mxu0 0.0
    %429 = vmatpush1.msra.mxu0 0.0
    %430 = vmatprep.subr.mxu0 %v392
    %431 = vmatpush1.msra.mxu0 %v391
    %432 = vmatprep.subr.mxu0 %v376
    %433 = vmatpush1.msra.mxu0 %v375
    %434 = vmatprep.subr.mxu0 %v384
    %435 = vmatpush1.msra.mxu0 %v383
    %436 = vmatprep.subr.mxu0 0.0
    %437 = vmatpush2.msra.mxu0 0.0
    %438 = vmatprep.subr.mxu0 0.0
    %439 = vmatpush2.msra.mxu0 0.0
    %440 = vmatprep.subr.mxu0 0.0
    %441 = vmatpush2.msra.mxu0 0.0
    %442 = vmatprep.subr.mxu0 0.0
    %443 = vmatpush2.msra.mxu0 0.0
    %444 = vmatprep.subr.mxu0 0.0
    %445 = vmatpush2.msra.mxu0 0.0
    %446 = vmatprep.subr.mxu0 0.0
    %447 = vmatpush2.msra.mxu0 0.0
    %448 = vmatprep.subr.mxu0 0.0
    %449 = vmatpush2.msra.mxu0 0.0
    %450 = vmatprep.subr.mxu0 0.0
    %451 = vmatpush2.msra.mxu0 0.0
    %452 = vmatprep.subr.mxu0 0.0
    %453 = vmatpush2.msra.mxu0 0.0
    %454 = vmatprep.subr.mxu0 0.0
    %455 = vmatpush2.msra.mxu0 0.0
    %456 = vmatprep.subr.mxu0 0.0
    %457 = vmatpush2.msra.mxu0 0.0
    %458 = vmatprep.subr.mxu0 0.0
    %459 = vmatpush2.msra.mxu0 0.0
    %460 = vmatprep.subr.mxu0 0.0
    %461 = vmatpush2.msra.mxu0 0.0
    %462 = vmatprep.subr.mxu0 0.0
    %463 = vmatpush2.msra.mxu0 0.0
    %464 = vmatprep.subr.mxu0 0.0
    %465 = vmatpush2.msra.mxu0 0.0
    %466 = vmatprep.subr.mxu0 0.0
    %467 = vmatpush2.msra.mxu0 0.0
    %468 = vmatprep.mubr.f32.mxu0 0.0
    %469 = vmatmul.mubr.f32.gmra.mxu0 %v402
    %v470 = vpop.f32.mrf.mxu0
    %v471 = vadd.f32 %v398, %v470
    %v472 = vpop.f32.mrf.mxu0
    %v473 = vadd.f32 %v398, %v472
    %474 = vdwg.mxu0
    %v475 = vmax.f32 %v471, 0.0
    %v476 = vmax.f32 %v473, 0.0
    %v477 = vadd.f32 %v475, %v255
    %v478 = vadd.f32 %v476, %v257
    %479 = vst [vmem:[#allocation2] sm:$0xff] %v477
    %480 = vst [vmem:[#allocation2 + $0x8] sm:$0xff] %v478
    // Predicated region
    $region30: #{resnet_block_forward.1} parent=1 // pred_check
      _
    $region31: #{resnet_block_forward.1} parent=1 // pred_check_branch
      %482 = sbr.rel (0) target = $region33
    $region32: #{resnet_block_forward.1} parent=1 // pred_region
      %s484 = ssub.s32 256, 256
      %485 = vsyncadd [#allocation3], %s484
      %s487 = sshll.u32 [#allocation2], 4
      %s488 = int_to_ptr.vmem [resolvable:$true] %s487
      %490 = dma.vmem_to_hbm [thread:$0]  %s488, 256, %s7, [#allocation3]
    $region33: #{resnet_block_forward.1} parent=1 // pred_fallthru
      _
    // Predicated region
    $region34: #{resnet_block_forward.1} parent=1 // pred_check
      _
    $region35: #{resnet_block_forward.1} parent=1 // pred_check_branch
      %492 = sbr.rel (0) target = $region37
    $region36: #{resnet_block_forward.1} parent=1 // pred_region
      %493 = dma.done [#allocation3], 256
    $region37: #{resnet_block_forward.1} parent=1 // pred_fallthru
      _
    %494 = vsyncpa [#allocation3], 1

</llo_original>
